<compile_context>
chip_gen: v7x
topology: tpu7x:2x2x1
jax: 0.10.0
libtpu: 0.0.40
codegen_flags: <defaults>
</compile_context>

<pallas_src>
import functools

import jax
import jax.numpy as jnp
from jax.experimental import pallas as pl
from jax.experimental.pallas import tpu as pltpu


def _round_up(x: int, m: int) -> int:
    return ((x + m - 1) // m) * m


def _mlp_kernel(s_ref, a_ref, w1s_ref, w1a_ref, b1_ref, w2_ref, b2_ref,
                w3_ref, b3_ref, o_ref, *, apply_softplus: bool):
    # s: (TB, Sd), a: (TB, Ad), w1s: (Sd, H), w1a: (Ad, H), b1/b2/w3: (1, H),
    # w2: (H, H), b3: (1, 1), o: (1, TB)
    h1 = jnp.tanh(
        jnp.dot(s_ref[...], w1s_ref[...], preferred_element_type=jnp.float32)
        + jnp.dot(a_ref[...], w1a_ref[...], preferred_element_type=jnp.float32)
        + b1_ref[...]
    )
    h2 = jnp.tanh(
        jnp.dot(h1, w2_ref[...], preferred_element_type=jnp.float32) + b2_ref[...]
    )
    # Final H->1 projection as w3_row @ h2^T so the result is already a
    # lane-dense (1, TB) row (same contraction pattern as q @ k^T).
    z = jax.lax.dot_general(
        w3_ref[...], h2,
        dimension_numbers=(((1,), (1,)), ((), ())),
        preferred_element_type=jnp.float32,
    ) + b3_ref[...]
    if apply_softplus:
        # Numerically stable softplus fused into the epilogue.
        z = jnp.maximum(z, 0.0) + jnp.log(1.0 + jnp.exp(-jnp.abs(z)))
    o_ref[...] = z.astype(o_ref.dtype)


def gail_discrim_forward(states, actions, packed_params, *,
                         apply_softplus: bool = False, batch_tile: int = 1024):
    """Pallas-backed forward: returns (batch, 1) logits (or rewards if fused)."""
    w1_s, w1_a, b1, w2, b2, w3_row, b3 = packed_params
    B, Sd = states.shape
    Ad = actions.shape[1]
    H = w2.shape[0]

    tb = min(batch_tile, _round_up(B, 8))
    num_tiles = pl.cdiv(B, tb)
    padded = num_tiles * tb

    kernel = functools.partial(_mlp_kernel, apply_softplus=apply_softplus)

    grid_spec = pltpu.PrefetchScalarGridSpec(
        num_scalar_prefetch=0,
        grid=(num_tiles,),
        in_specs=[
            pl.BlockSpec((tb, Sd), lambda i: (i, 0)),   # states tile
            pl.BlockSpec((tb, Ad), lambda i: (i, 0)),   # actions tile
            pl.BlockSpec((Sd, H), lambda i: (0, 0)),    # w1 (state part), resident
            pl.BlockSpec((Ad, H), lambda i: (0, 0)),    # w1 (action part), resident
            pl.BlockSpec((1, H), lambda i: (0, 0)),     # b1
            pl.BlockSpec((H, H), lambda i: (0, 0)),     # w2
            pl.BlockSpec((1, H), lambda i: (0, 0)),     # b2
            pl.BlockSpec((1, H), lambda i: (0, 0)),     # w3 as a row
            pl.BlockSpec((1, 1), lambda i: (0, 0)),     # b3
        ],
        out_specs=pl.BlockSpec((1, tb), lambda i: (0, i)),  # lane-dense output row
    )

    flops = 2 * B * ((Sd + Ad) * H + H * H + H)
    transcendentals = B * (2 * H + (1 if apply_softplus else 0))
    bytes_accessed = 4 * (B * (Sd + Ad) + B + (Sd + Ad) * H + H * H + 3 * H + 1)

    out = pl.pallas_call(
        kernel,
        out_shape=jax.ShapeDtypeStruct((1, padded), jnp.float32),
        grid_spec=grid_spec,
        compiler_params=pltpu.CompilerParams(
            dimension_semantics=("parallel",),
        ),
        cost_estimate=pl.CostEstimate(
            flops=flops,
            transcendentals=transcendentals,
            bytes_accessed=bytes_accessed,
        ),
    )(states, actions, w1_s, w1_a, b1, w2, b2, w3_row, b3)

    return out[0, :B].reshape(B, 1)


def calculate_reward(states, actions, packed_params):
    # -logsigmoid(-D(s,a)) == softplus(D(s,a)), fused into the kernel epilogue.
    return gail_discrim_forward(states, actions, packed_params, apply_softplus=True)


def init_params(key, state_dim, action_dim, hidden_units=(100, 100)):
    """Deterministic PyTorch-Linear-style init (uniform +/- 1/sqrt(fan_in))."""
    dims = [state_dim + action_dim, *hidden_units, 1]
    params = []
    for i in range(len(dims) - 1):
        fan_in, fan_out = dims[i], dims[i + 1]
        key, kw, kb = jax.random.split(key, 3)
        bound = 1.0 / jnp.sqrt(jnp.float32(fan_in))
        w = jax.random.uniform(kw, (fan_in, fan_out), jnp.float32, -bound, bound)
        b = jax.random.uniform(kb, (1, fan_out), jnp.float32, -bound, bound)
        params.extend([w, b])
    return tuple(params)


def pack_params(params, state_dim, lane_pad=128):
    """One-time repack: split w1 by (states|actions), zero-pad hidden 100->128,
    store w3 as a (1, H) row.  Numerically identical to the unpadded MLP."""
    w1, b1, w2, b2, w3, b3 = params
    h = w1.shape[1]
    hp = _round_up(h, lane_pad)
    pad_cols = lambda m: jnp.pad(m, ((0, 0), (0, hp - m.shape[1])))
    w1p = pad_cols(w1)                                   # (D_in, Hp)
    w1_s, w1_a = w1p[:state_dim], w1p[state_dim:]        # (Sd, Hp), (Ad, Hp)
    b1p = pad_cols(b1)                                   # (1, Hp)
    w2p = jnp.pad(w2, ((0, hp - h), (0, hp - h)))        # (Hp, Hp)
    b2p = pad_cols(b2)                                   # (1, Hp)
    w3_row = jnp.pad(w3.reshape(1, h), ((0, 0), (0, hp - h)))  # (1, Hp)
    return (w1_s, w1_a, b1p, w2p, b2p, w3_row, b3)


def _reference_forward(states, actions, params):
    w1, b1, w2, b2, w3, b3 = params
    x = jnp.concatenate([states, actions], axis=-1)
    h1 = jnp.tanh(x @ w1 + b1)
    h2 = jnp.tanh(h1 @ w2 + b2)
    return h2 @ w3 + b3


if __name__ == "__main__":
    key = jax.random.PRNGKey(0)
    k_s, k_a, k_p = jax.random.split(key, 3)

    batch, state_dim, action_dim = 8, 11, 3
    states = jax.random.normal(k_s, (batch, state_dim), jnp.float32)
    actions = jax.random.normal(k_a, (batch, action_dim), jnp.float32)
    params = init_params(k_p, state_dim, action_dim, hidden_units=(100, 100))
    packed = pack_params(params, state_dim)

    logits = jax.block_until_ready(gail_discrim_forward(states, actions, packed))
    ref = _reference_forward(states, actions, params)
    assert logits.shape == (batch, 1)
    assert jnp.allclose(logits, ref, atol=1e-4, rtol=1e-4)

    rewards = jax.block_until_ready(calculate_reward(states, actions, packed))
    assert rewards.shape == (batch, 1)
    assert jnp.allclose(rewards, jax.nn.softplus(ref), atol=1e-4, rtol=1e-4)

    print("KERNEL_OK")
</pallas_src>

<mosaic_0001>
module attributes {stable_mosaic.version = 11 : i64} {
  func.func @_mlp_kernel(%arg0: i32, %arg1: memref<8x11xf32, #tpu.memory_space<vmem>>, %arg2: memref<8x3xf32, #tpu.memory_space<vmem>>, %arg3: memref<11x128xf32, #tpu.memory_space<vmem>>, %arg4: memref<3x128xf32, #tpu.memory_space<vmem>>, %arg5: memref<1x128xf32, #tpu.memory_space<vmem>>, %arg6: memref<128x128xf32, #tpu.memory_space<vmem>>, %arg7: memref<1x128xf32, #tpu.memory_space<vmem>>, %arg8: memref<1x128xf32, #tpu.memory_space<vmem>>, %arg9: memref<1x1xf32, #tpu.memory_space<vmem>>, %arg10: memref<1x8xf32, #tpu.memory_space<vmem>>) attributes {dimension_semantics = [#tpu.dimension_semantics<parallel>], iteration_bounds = array<i64: 1>, scalar_prefetch = 0 : i64, scratch_operands = 0 : i64, tpu.core_type = #tpu.core_type<tc>, window_params = [{transform_indices = @transform_0, window_bounds = array<i64: 8, 11>}, {transform_indices = @transform_1, window_bounds = array<i64: 8, 3>}, {pipeline_mode = #tpu.pipeline_mode<synchronous>, transform_indices = @transform_2, window_bounds = array<i64: 11, 128>}, {pipeline_mode = #tpu.pipeline_mode<synchronous>, transform_indices = @transform_3, window_bounds = array<i64: 3, 128>}, {pipeline_mode = #tpu.pipeline_mode<synchronous>, transform_indices = @transform_4, window_bounds = array<i64: 1, 128>}, {pipeline_mode = #tpu.pipeline_mode<synchronous>, transform_indices = @transform_5, window_bounds = array<i64: 128, 128>}, {pipeline_mode = #tpu.pipeline_mode<synchronous>, transform_indices = @transform_6, window_bounds = array<i64: 1, 128>}, {pipeline_mode = #tpu.pipeline_mode<synchronous>, transform_indices = @transform_7, window_bounds = array<i64: 1, 128>}, {pipeline_mode = #tpu.pipeline_mode<synchronous>, transform_indices = @transform_8, window_bounds = array<i64: 1, 1>}, {transform_indices = @transform_9, window_bounds = array<i64: 1, 8>}]} {
    %c0 = arith.constant 0 : index
    %c0_0 = arith.constant 0 : index
    %0 = vector.load %arg1[%c0, %c0_0] : memref<8x11xf32, #tpu.memory_space<vmem>>, vector<8x11xf32>
    %c0_1 = arith.constant 0 : index
    %c0_2 = arith.constant 0 : index
    %1 = vector.load %arg3[%c0_1, %c0_2] : memref<11x128xf32, #tpu.memory_space<vmem>>, vector<11x128xf32>
    %cst = arith.constant dense<0.000000e+00> : vector<8x128xf32>
    %2 = tpu.matmul %0, %1, %cst {dimension_numbers = #tpu.dot_dimension_numbers<[1], [0], [0], [1], [0, 0, 1, 1], [], []>} : vector<8x11xf32>, vector<11x128xf32>, vector<8x128xf32> -> vector<8x128xf32>
    %c0_3 = arith.constant 0 : index
    %c0_4 = arith.constant 0 : index
    %3 = vector.load %arg2[%c0_3, %c0_4] : memref<8x3xf32, #tpu.memory_space<vmem>>, vector<8x3xf32>
    %c0_5 = arith.constant 0 : index
    %c0_6 = arith.constant 0 : index
    %4 = vector.load %arg4[%c0_5, %c0_6] : memref<3x128xf32, #tpu.memory_space<vmem>>, vector<3x128xf32>
    %cst_7 = arith.constant dense<0.000000e+00> : vector<8x128xf32>
    %5 = tpu.matmul %3, %4, %cst_7 {dimension_numbers = #tpu.dot_dimension_numbers<[1], [0], [0], [1], [0, 0, 1, 1], [], []>} : vector<8x3xf32>, vector<3x128xf32>, vector<8x128xf32> -> vector<8x128xf32>
    %6 = arith.addf %2, %5 : vector<8x128xf32>
    %c0_8 = arith.constant 0 : index
    %c0_9 = arith.constant 0 : index
    %7 = vector.load %arg5[%c0_8, %c0_9] : memref<1x128xf32, #tpu.memory_space<vmem>>, vector<1x128xf32>
    %8 = vector.broadcast %7 : vector<1x128xf32> to vector<8x128xf32>
    %9 = arith.addf %6, %8 : vector<8x128xf32>
    %10 = math.tanh %9 : vector<8x128xf32>
    %c0_10 = arith.constant 0 : index
    %c0_11 = arith.constant 0 : index
    %11 = vector.load %arg6[%c0_10, %c0_11] : memref<128x128xf32, #tpu.memory_space<vmem>>, vector<128x128xf32>
    %cst_12 = arith.constant dense<0.000000e+00> : vector<8x128xf32>
    %12 = tpu.matmul %10, %11, %cst_12 {dimension_numbers = #tpu.dot_dimension_numbers<[1], [0], [0], [1], [0, 0, 1, 1], [], []>} : vector<8x128xf32>, vector<128x128xf32>, vector<8x128xf32> -> vector<8x128xf32>
    %c0_13 = arith.constant 0 : index
    %c0_14 = arith.constant 0 : index
    %13 = vector.load %arg7[%c0_13, %c0_14] : memref<1x128xf32, #tpu.memory_space<vmem>>, vector<1x128xf32>
    %14 = vector.broadcast %13 : vector<1x128xf32> to vector<8x128xf32>
    %15 = arith.addf %12, %14 : vector<8x128xf32>
    %16 = math.tanh %15 : vector<8x128xf32>
    %c0_15 = arith.constant 0 : index
    %c0_16 = arith.constant 0 : index
    %17 = vector.load %arg8[%c0_15, %c0_16] : memref<1x128xf32, #tpu.memory_space<vmem>>, vector<1x128xf32>
    %cst_17 = arith.constant dense<0.000000e+00> : vector<1x8xf32>
    %18 = tpu.matmul %17, %16, %cst_17 {dimension_numbers = #tpu.dot_dimension_numbers<[1], [1], [0], [0], [0, 0, 1, 0], [], []>} : vector<1x128xf32>, vector<8x128xf32>, vector<1x8xf32> -> vector<1x8xf32>
    %c0_18 = arith.constant 0 : index
    %c0_19 = arith.constant 0 : index
    %19 = vector.load %arg9[%c0_18, %c0_19] : memref<1x1xf32, #tpu.memory_space<vmem>>, vector<1x1xf32>
    %20 = vector.broadcast %19 : vector<1x1xf32> to vector<1x8xf32>
    %21 = arith.addf %18, %20 : vector<1x8xf32>
    %c0_20 = arith.constant 0 : index
    %c0_21 = arith.constant 0 : index
    %22 = vector.load %arg10[%c0_20, %c0_21] : memref<1x8xf32, #tpu.memory_space<vmem>>, vector<1x8xf32>
    tpu.vector_store %arg10[%c0_20, %c0_21], %21 {strides = array<i32>} : memref<1x8xf32, #tpu.memory_space<vmem>>, vector<1x8xf32>,
    return
  }
  func.func @transform_0(%arg0: i32) -> (i32, i32) {
    %c0_i32 = arith.constant 0 : i32
    %c0_i32_0 = arith.constant 0 : i32
    return %arg0, %c0_i32 : i32, i32
  }
  func.func @transform_1(%arg0: i32) -> (i32, i32) {
    %c0_i32 = arith.constant 0 : i32
    %c0_i32_0 = arith.constant 0 : i32
    return %arg0, %c0_i32 : i32, i32
  }
  func.func @transform_2(%arg0: i32) -> (i32, i32) {
    %c0_i32 = arith.constant 0 : i32
    %c0_i32_0 = arith.constant 0 : i32
    %c0_i32_1 = arith.constant 0 : i32
    return %c0_i32, %c0_i32_0 : i32, i32
  }
  func.func @transform_3(%arg0: i32) -> (i32, i32) {
    %c0_i32 = arith.constant 0 : i32
    %c0_i32_0 = arith.constant 0 : i32
    %c0_i32_1 = arith.constant 0 : i32
    return %c0_i32, %c0_i32_0 : i32, i32
  }
  func.func @transform_4(%arg0: i32) -> (i32, i32) {
    %c0_i32 = arith.constant 0 : i32
    %c0_i32_0 = arith.constant 0 : i32
    %c0_i32_1 = arith.constant 0 : i32
    return %c0_i32, %c0_i32_0 : i32, i32
  }
  func.func @transform_5(%arg0: i32) -> (i32, i32) {
    %c0_i32 = arith.constant 0 : i32
    %c0_i32_0 = arith.constant 0 : i32
    %c0_i32_1 = arith.constant 0 : i32
    return %c0_i32, %c0_i32_0 : i32, i32
  }
  func.func @transform_6(%arg0: i32) -> (i32, i32) {
    %c0_i32 = arith.constant 0 : i32
    %c0_i32_0 = arith.constant 0 : i32
    %c0_i32_1 = arith.constant 0 : i32
    return %c0_i32, %c0_i32_0 : i32, i32
  }
  func.func @transform_7(%arg0: i32) -> (i32, i32) {
    %c0_i32 = arith.constant 0 : i32
    %c0_i32_0 = arith.constant 0 : i32
    %c0_i32_1 = arith.constant 0 : i32
    return %c0_i32, %c0_i32_0 : i32, i32
  }
  func.func @transform_8(%arg0: i32) -> (i32, i32) {
    %c0_i32 = arith.constant 0 : i32
    %c0_i32_0 = arith.constant 0 : i32
    %c0_i32_1 = arith.constant 0 : i32
    return %c0_i32, %c0_i32_0 : i32, i32
  }
  func.func @transform_9(%arg0: i32) -> (i32, i32) {
    %c0_i32 = arith.constant 0 : i32
    %c0_i32_0 = arith.constant 0 : i32
    return %c0_i32, %arg0 : i32, i32
  }
}

</mosaic_0001>

<llo_original>
// kernel: tpu_custom_call.1
$region0: #{tpu_custom_call.1}
  #allocation0 [shape = 'u32[]', space=smem, size = 0x4, offset = 0x4, fixed_abs, tag = 'smem constant byte address 0x4 - core index']
  #allocation1 [shape = 'u32[144,128]{1,0:T(1,128)}', space=vmem, size = 0x12000, scoped, tag = 'internal scratch']
  #allocation2 [shape = 'f32[1,1]{1,0:T(1,128)S(1)}', space=vmem, size = 0x200, scoped, tag = 'scoped memory for tpu_custom_call.1']
  %s0 = inlined_call_operand.hbm [shape: f32[8,11], index: 0, kind: input, shape index: {}]
  %s1 = inlined_call_operand.vmem [shape: f32[8,3], index: 1, kind: input, shape index: {}]
  %s2 = inlined_call_operand.vmem [shape: f32[11,128], index: 2, kind: input, shape index: {}]
  %s3 = inlined_call_operand.vmem [shape: f32[3,128], index: 3, kind: input, shape index: {}]
  %s4 = inlined_call_operand.vmem [shape: f32[1,128], index: 4, kind: input, shape index: {}]
  %s5 = inlined_call_operand.hbm [shape: f32[128,128], index: 5, kind: input, shape index: {}]
  %s6 = inlined_call_operand.vmem [shape: f32[1,128], index: 6, kind: input, shape index: {}]
  %s7 = inlined_call_operand.vmem [shape: f32[1,128], index: 7, kind: input, shape index: {}]
  %s8 = inlined_call_operand.<no memory space> [shape: f32[1,1], index: 8, kind: input, shape index: {}]
  %s9 = inlined_call_operand.hbm [shape: f32[1,8], index: 9, kind: output, shape index: {}]
  %s10 = sld [smem:[#allocation0]]
  $region54: #{tpu_custom_call.1} parent=0
    _
  %s12 = ssub.s32 1, %s10
  %s13 = scalar_select 0, %s12, %s10
  %v14 = vstv %s8
  %15 = vst [vmem:[#allocation2] sm:$0x1] %v14
  $region1: #{tpu_custom_call.1} parent=0
    #allocation3 [shape = 'u8[4096]{0}', space=vmem, size = 0x1000, scoped, tag = 'input window, operand 0, single buffered']
    #allocation4 [shape = 's32[1]{0}', space=sflag, size = 0x4, scoped, tag = 'scoped memory for tpu_custom_call.1']
    #allocation5 [shape = 's32[1]{0}', space=sflag, size = 0x4, scoped, tag = 'scoped memory for tpu_custom_call.1']
    #allocation6 [shape = 'u8[65536]{0}', space=vmem, size = 0x10000, scoped, tag = 'input window, operand 5, single buffered']
    #allocation7 [shape = 's32[1]{0}', space=sflag, size = 0x4, scoped, tag = 'scoped memory for tpu_custom_call.1']
    #allocation8 [shape = 'u8[512]{0}', space=vmem, size = 0x400, scoped, tag = 'output window, operand 0, single buffered']
    %16 = vsyncpa [#allocation4], 0
    %17 = vsyncpa [#allocation7], 0
    %18 = vsyncpa [#allocation5], 0
    // Predicated region
    $region2: #{tpu_custom_call.1} parent=1 // pred_check
      _
    $region3: #{tpu_custom_call.1} parent=1 // pred_check_branch
      %20 = sbr.rel (0) target = $region5
    $region4: #{tpu_custom_call.1} parent=1 // pred_region
      %s22 = ssub.s32 128, 128
      %23 = vsyncadd [#allocation4], %s22
      %s25 = sshll.u32 [#allocation3], 4
      %s26 = int_to_ptr.vmem [resolvable:$true] %s25
      %28 = dma.hbm_to_vmem [thread:$0]  %s0, 128, %s26, [#allocation4]
    $region5: #{tpu_custom_call.1} parent=1 // pred_fallthru
      _
    // Predicated region
    $region6: #{tpu_custom_call.1} parent=1 // pred_check
      _
    $region7: #{tpu_custom_call.1} parent=1 // pred_check_branch
      %30 = sbr.rel (0) target = $region9
    $region8: #{tpu_custom_call.1} parent=1 // pred_region
      _
    $region9: #{tpu_custom_call.1} parent=1 // pred_fallthru
      _
    // Predicated region
    $region10: #{tpu_custom_call.1} parent=1 // pred_check
      _
    $region11: #{tpu_custom_call.1} parent=1 // pred_check_branch
      %32 = sbr.rel (0) target = $region13
    $region12: #{tpu_custom_call.1} parent=1 // pred_region
      _
    $region13: #{tpu_custom_call.1} parent=1 // pred_fallthru
      _
    // Predicated region
    $region14: #{tpu_custom_call.1} parent=1 // pred_check
      _
    $region15: #{tpu_custom_call.1} parent=1 // pred_check_branch
      %34 = sbr.rel (0) target = $region17
    $region16: #{tpu_custom_call.1} parent=1 // pred_region
      _
    $region17: #{tpu_custom_call.1} parent=1 // pred_fallthru
      _
    // Predicated region
    $region18: #{tpu_custom_call.1} parent=1 // pred_check
      _
    $region19: #{tpu_custom_call.1} parent=1 // pred_check_branch
      %36 = sbr.rel (0) target = $region21
    $region20: #{tpu_custom_call.1} parent=1 // pred_region
      _
    $region21: #{tpu_custom_call.1} parent=1 // pred_fallthru
      _
    // Predicated region
    $region22: #{tpu_custom_call.1} parent=1 // pred_check
      _
    $region23: #{tpu_custom_call.1} parent=1 // pred_check_branch
      %38 = sbr.rel (0) target = $region25
    $region24: #{tpu_custom_call.1} parent=1 // pred_region
      %s40 = ssub.s32 2048, 2048
      %41 = vsyncadd [#allocation7], %s40
      %s42 = sshll.u32 [#allocation6], 4
      %s43 = int_to_ptr.vmem [resolvable:$true] %s42
      %48 = dma.hbm_to_vmem [thread:$0]  %s5, 2048, %s43, [#allocation7], 128, 128, 8
    $region25: #{tpu_custom_call.1} parent=1 // pred_fallthru
      _
    // Predicated region
    $region26: #{tpu_custom_call.1} parent=1 // pred_check
      _
    $region27: #{tpu_custom_call.1} parent=1 // pred_check_branch
      %50 = sbr.rel (0) target = $region29
    $region28: #{tpu_custom_call.1} parent=1 // pred_region
      _
    $region29: #{tpu_custom_call.1} parent=1 // pred_fallthru
      _
    // Predicated region
    $region30: #{tpu_custom_call.1} parent=1 // pred_check
      _
    $region31: #{tpu_custom_call.1} parent=1 // pred_check_branch
      %52 = sbr.rel (0) target = $region33
    $region32: #{tpu_custom_call.1} parent=1 // pred_region
      _
    $region33: #{tpu_custom_call.1} parent=1 // pred_fallthru
      _
    // Predicated region
    $region34: #{tpu_custom_call.1} parent=1 // pred_check
      _
    $region35: #{tpu_custom_call.1} parent=1 // pred_check_branch
      %54 = sbr.rel (0) target = $region37
    $region36: #{tpu_custom_call.1} parent=1 // pred_region
      _
    $region37: #{tpu_custom_call.1} parent=1 // pred_fallthru
      _
    // Predicated region
    $region38: #{tpu_custom_call.1} parent=1 // pred_check
      _
    $region39: #{tpu_custom_call.1} parent=1 // pred_check_branch
      %56 = sbr.rel (0) target = $region41
    $region40: #{tpu_custom_call.1} parent=1 // pred_region
      %57 = dma.done [#allocation4], 128
    $region41: #{tpu_custom_call.1} parent=1 // pred_fallthru
      _
    // Predicated region
    $region42: #{tpu_custom_call.1} parent=1 // pred_check
      _
    $region43: #{tpu_custom_call.1} parent=1 // pred_check_branch
      %59 = sbr.rel (0) target = $region45
    $region44: #{tpu_custom_call.1} parent=1 // pred_region
      %60 = dma.done [#allocation7], 2048
    $region45: #{tpu_custom_call.1} parent=1 // pred_fallthru
      _
    %v61 = vld [vmem:[#allocation3] sm:$0xff]
    %v62 = vld [vmem:[%s2] sm:$0xff]
    %v63 = vld [vmem:[%s2 + $0x8] sm:$0x7]
    %v64 = vld [vmem:[%s1] sm:$0xff]
    %v65 = vld [vmem:[%s3] sm:$0x7]
    %vm66 = vcmask 23552
    %v68 = vsel %vm66, %v64, 0
    %vm70 = vcmask 1042432
    %v72 = vsel %vm70, %v65, 0
    %74 = vmatprep.subr.mxu0 0.0
    %75 = vmatpush1.msra.mxu0 %v72
    %76 = vmatprep.subr.mxu0 0.0
    %77 = vmatpush1.msra.mxu0 0.0
    %78 = vmatprep.subr.mxu0 0.0
    %79 = vmatpush1.msra.mxu0 0.0
    %80 = vmatprep.subr.mxu0 0.0
    %81 = vmatpush1.msra.mxu0 0.0
    %82 = vmatprep.subr.mxu0 0.0
    %83 = vmatpush1.msra.mxu0 0.0
    %84 = vmatprep.subr.mxu0 0.0
    %85 = vmatpush1.msra.mxu0 0.0
    %86 = vmatprep.subr.mxu0 0.0
    %87 = vmatpush1.msra.mxu0 0.0
    %88 = vmatprep.subr.mxu0 0.0
    %89 = vmatpush1.msra.mxu0 0.0
    %90 = vmatprep.subr.mxu0 0.0
    %91 = vmatpush1.msra.mxu0 0.0
    %92 = vmatprep.subr.mxu0 0.0
    %93 = vmatpush1.msra.mxu0 0.0
    %94 = vmatprep.subr.mxu0 0.0
    %95 = vmatpush1.msra.mxu0 0.0
    %96 = vmatprep.subr.mxu0 0.0
    %97 = vmatpush1.msra.mxu0 0.0
    %98 = vmatprep.subr.mxu0 0.0
    %99 = vmatpush1.msra.mxu0 0.0
    %100 = vmatprep.subr.mxu0 0.0
    %101 = vmatpush1.msra.mxu0 0.0
    %102 = vmatprep.subr.mxu0 0.0
    %103 = vmatpush1.msra.mxu0 0.0
    %104 = vmatprep.subr.mxu0 0.0
    %105 = vmatpush1.msra.mxu0 0.0
    %106 = vmatprep.subr.mxu0 0.0
    %107 = vmatpush1.msra.mxu0 0.0
    %108 = vmatprep.subr.mxu0 0.0
    %109 = vmatpush1.msra.mxu0 0.0
    %110 = vmatprep.subr.mxu0 0.0
    %111 = vmatpush1.msra.mxu0 0.0
    %112 = vmatprep.subr.mxu0 0.0
    %113 = vmatpush1.msra.mxu0 0.0
    %114 = vmatprep.subr.mxu0 0.0
    %115 = vmatpush1.msra.mxu0 0.0
    %116 = vmatprep.subr.mxu0 0.0
    %117 = vmatpush1.msra.mxu0 0.0
    %118 = vmatprep.subr.mxu0 0.0
    %119 = vmatpush1.msra.mxu0 0.0
    %120 = vmatprep.subr.mxu0 0.0
    %121 = vmatpush1.msra.mxu0 0.0
    %122 = vmatprep.subr.mxu0 0.0
    %123 = vmatpush1.msra.mxu0 0.0
    %124 = vmatprep.subr.mxu0 0.0
    %125 = vmatpush1.msra.mxu0 0.0
    %126 = vmatprep.subr.mxu0 0.0
    %127 = vmatpush1.msra.mxu0 0.0
    %128 = vmatprep.subr.mxu0 0.0
    %129 = vmatpush1.msra.mxu0 0.0
    %130 = vmatprep.subr.mxu0 0.0
    %131 = vmatpush1.msra.mxu0 0.0
    %132 = vmatprep.subr.mxu0 0.0
    %133 = vmatpush1.msra.mxu0 0.0
    %134 = vmatprep.subr.mxu0 0.0
    %135 = vmatpush1.msra.mxu0 0.0
    %136 = vmatprep.subr.mxu0 0.0
    %137 = vmatpush1.msra.mxu0 0.0
    %138 = vmatprep.mubr.f32.mxu0 0.0
    %139 = vmatmul.mubr.f32.gmra.mrb[0].mxu0 %v68
    %v140 = vpop.f32.mrb[0].mxu0
    %v141 = vadd.f32 0.0, %v140
    %v142 = vpop.f32.mrb[0].mxu0
    %143 = vdwg.mxu0
    %vm144 = vcmask 89088
    %v146 = vsel %vm144, %v61, 0
    %v149 = vsel %vm70, %v63, 0
    %151 = vmatprep.subr.mxu0 0.0
    %152 = vmatpush1.msra.mxu0 %v62
    %153 = vmatprep.subr.mxu0 0.0
    %154 = vmatpush1.msra.mxu0 %v149
    %155 = vmatprep.subr.mxu0 0.0
    %156 = vmatpush1.msra.mxu0 0.0
    %157 = vmatprep.subr.mxu0 0.0
    %158 = vmatpush1.msra.mxu0 0.0
    %159 = vmatprep.subr.mxu0 0.0
    %160 = vmatpush1.msra.mxu0 0.0
    %161 = vmatprep.subr.mxu0 0.0
    %162 = vmatpush1.msra.mxu0 0.0
    %163 = vmatprep.subr.mxu0 0.0
    %164 = vmatpush1.msra.mxu0 0.0
    %165 = vmatprep.subr.mxu0 0.0
    %166 = vmatpush1.msra.mxu0 0.0
    %167 = vmatprep.subr.mxu0 0.0
    %168 = vmatpush1.msra.mxu0 0.0
    %169 = vmatprep.subr.mxu0 0.0
    %170 = vmatpush1.msra.mxu0 0.0
    %171 = vmatprep.subr.mxu0 0.0
    %172 = vmatpush1.msra.mxu0 0.0
    %173 = vmatprep.subr.mxu0 0.0
    %174 = vmatpush1.msra.mxu0 0.0
    %175 = vmatprep.subr.mxu0 0.0
    %176 = vmatpush1.msra.mxu0 0.0
    %177 = vmatprep.subr.mxu0 0.0
    %178 = vmatpush1.msra.mxu0 0.0
    %179 = vmatprep.subr.mxu0 0.0
    %180 = vmatpush1.msra.mxu0 0.0
    %181 = vmatprep.subr.mxu0 0.0
    %182 = vmatpush1.msra.mxu0 0.0
    %183 = vmatprep.subr.mxu0 0.0
    %184 = vmatpush1.msra.mxu0 0.0
    %185 = vmatprep.subr.mxu0 0.0
    %186 = vmatpush1.msra.mxu0 0.0
    %187 = vmatprep.subr.mxu0 0.0
    %188 = vmatpush1.msra.mxu0 0.0
    %189 = vmatprep.subr.mxu0 0.0
    %190 = vmatpush1.msra.mxu0 0.0
    %191 = vmatprep.subr.mxu0 0.0
    %192 = vmatpush1.msra.mxu0 0.0
    %193 = vmatprep.subr.mxu0 0.0
    %194 = vmatpush1.msra.mxu0 0.0
    %195 = vmatprep.subr.mxu0 0.0
    %196 = vmatpush1.msra.mxu0 0.0
    %197 = vmatprep.subr.mxu0 0.0
    %198 = vmatpush1.msra.mxu0 0.0
    %199 = vmatprep.subr.mxu0 0.0
    %200 = vmatpush1.msra.mxu0 0.0
    %201 = vmatprep.subr.mxu0 0.0
    %202 = vmatpush1.msra.mxu0 0.0
    %203 = vmatprep.subr.mxu0 0.0
    %204 = vmatpush1.msra.mxu0 0.0
    %205 = vmatprep.subr.mxu0 0.0
    %206 = vmatpush1.msra.mxu0 0.0
    %207 = vmatprep.subr.mxu0 0.0
    %208 = vmatpush1.msra.mxu0 0.0
    %209 = vmatprep.subr.mxu0 0.0
    %210 = vmatpush1.msra.mxu0 0.0
    %211 = vmatprep.subr.mxu0 0.0
    %212 = vmatpush1.msra.mxu0 0.0
    %213 = vmatprep.subr.mxu0 0.0
    %214 = vmatpush1.msra.mxu0 0.0
    %215 = vmatprep.mubr.f32.mxu0 0.0
    %216 = vmatmul.mubr.f32.gmra.mrb[0].mxu0 %v146
    %v217 = vpop.f32.mrb[0].mxu0
    %v218 = vadd.f32 %v141, %v217
    %v219 = vpop.f32.mrb[0].mxu0
    %220 = vdwg.mxu0
    %v221 = vld [vmem:[%s4] sm:$0x1]
    %v223 = vlaneseq
    %v224 = vshrl.u32 %v223, 7
    %v225 = vsub.s32 0, %v224
    %v226 = vrot.slane %v221, %v225
    %v228 = vadd.f32 %v218, %v226
    %v229 = vtanh.pop %v228
    %v230 = vld [vmem:[#allocation6] sm:$0xff]
    %v231 = vld [vmem:[#allocation6 + $0x8] sm:$0xff]
    %v232 = vld [vmem:[#allocation6 + $0x10] sm:$0xff]
    %v233 = vld [vmem:[#allocation6 + $0x18] sm:$0xff]
    %v234 = vld [vmem:[#allocation6 + $0x20] sm:$0xff]
    %v235 = vld [vmem:[#allocation6 + $0x28] sm:$0xff]
    %v236 = vld [vmem:[#allocation6 + $0x30] sm:$0xff]
    %v237 = vld [vmem:[#allocation6 + $0x38] sm:$0xff]
    %v238 = vld [vmem:[#allocation6 + $0x40] sm:$0xff]
    %v239 = vld [vmem:[#allocation6 + $0x48] sm:$0xff]
    %v240 = vld [vmem:[#allocation6 + $0x50] sm:$0xff]
    %v241 = vld [vmem:[#allocation6 + $0x58] sm:$0xff]
    %v242 = vld [vmem:[#allocation6 + $0x60] sm:$0xff]
    %v243 = vld [vmem:[#allocation6 + $0x68] sm:$0xff]
    %v244 = vld [vmem:[#allocation6 + $0x70] sm:$0xff]
    %v245 = vld [vmem:[#allocation6 + $0x78] sm:$0xff]
    %v246 = vld [vmem:[%s6] sm:$0x1]
    %v248 = vlaneseq
    %v249 = vshrl.u32 %v248, 7
    %v250 = vsub.s32 0, %v249
    %v251 = vrot.slane %v246, %v250
    %253 = vmatprep.subr.mxu0 0.0
    %254 = vmatpush1.msra.mxu0 %v230
    %255 = vmatprep.subr.mxu0 0.0
    %256 = vmatpush1.msra.mxu0 %v231
    %257 = vmatprep.subr.mxu0 0.0
    %258 = vmatpush1.msra.mxu0 %v232
    %259 = vmatprep.subr.mxu0 0.0
    %260 = vmatpush1.msra.mxu0 %v233
    %261 = vmatprep.subr.mxu0 0.0
    %262 = vmatpush1.msra.mxu0 %v234
    %263 = vmatprep.subr.mxu0 0.0
    %264 = vmatpush1.msra.mxu0 %v235
    %265 = vmatprep.subr.mxu0 0.0
    %266 = vmatpush1.msra.mxu0 %v236
    %267 = vmatprep.subr.mxu0 0.0
    %268 = vmatpush1.msra.mxu0 %v237
    %269 = vmatprep.subr.mxu0 0.0
    %270 = vmatpush1.msra.mxu0 %v238
    %271 = vmatprep.subr.mxu0 0.0
    %272 = vmatpush1.msra.mxu0 %v239
    %273 = vmatprep.subr.mxu0 0.0
    %274 = vmatpush1.msra.mxu0 %v240
    %275 = vmatprep.subr.mxu0 0.0
    %276 = vmatpush1.msra.mxu0 %v241
    %277 = vmatprep.subr.mxu0 0.0
    %278 = vmatpush1.msra.mxu0 %v242
    %279 = vmatprep.subr.mxu0 0.0
    %280 = vmatpush1.msra.mxu0 %v243
    %281 = vmatprep.subr.mxu0 0.0
    %282 = vmatpush1.msra.mxu0 %v244
    %283 = vmatprep.subr.mxu0 0.0
    %284 = vmatpush1.msra.mxu0 %v245
    %285 = vmatprep.subr.mxu0 0.0
    %286 = vmatpush1.msra.mxu0 0.0
    %287 = vmatprep.subr.mxu0 0.0
    %288 = vmatpush1.msra.mxu0 0.0
    %289 = vmatprep.subr.mxu0 0.0
    %290 = vmatpush1.msra.mxu0 0.0
    %291 = vmatprep.subr.mxu0 0.0
    %292 = vmatpush1.msra.mxu0 0.0
    %293 = vmatprep.subr.mxu0 0.0
    %294 = vmatpush1.msra.mxu0 0.0
    %295 = vmatprep.subr.mxu0 0.0
    %296 = vmatpush1.msra.mxu0 0.0
    %297 = vmatprep.subr.mxu0 0.0
    %298 = vmatpush1.msra.mxu0 0.0
    %299 = vmatprep.subr.mxu0 0.0
    %300 = vmatpush1.msra.mxu0 0.0
    %301 = vmatprep.subr.mxu0 0.0
    %302 = vmatpush1.msra.mxu0 0.0
    %303 = vmatprep.subr.mxu0 0.0
    %304 = vmatpush1.msra.mxu0 0.0
    %305 = vmatprep.subr.mxu0 0.0
    %306 = vmatpush1.msra.mxu0 0.0
    %307 = vmatprep.subr.mxu0 0.0
    %308 = vmatpush1.msra.mxu0 0.0
    %309 = vmatprep.subr.mxu0 0.0
    %310 = vmatpush1.msra.mxu0 0.0
    %311 = vmatprep.subr.mxu0 0.0
    %312 = vmatpush1.msra.mxu0 0.0
    %313 = vmatprep.subr.mxu0 0.0
    %314 = vmatpush1.msra.mxu0 0.0
    %315 = vmatprep.subr.mxu0 0.0
    %316 = vmatpush1.msra.mxu0 0.0
    %317 = vmatprep.mubr.f32.mxu0 0.0
    %318 = vmatmul.mubr.f32.gmra.mrb[0].mxu0 %v229
    %v319 = vpop.f32.mrb[0].mxu0
    %v320 = vadd.f32 %v251, %v319
    %v321 = vpop.f32.mrb[0].mxu0
    %322 = vdwg.mxu0
    %v323 = vtanh.pop %v320
    %v324 = vld [vmem:[%s7] sm:$0x1]
    %v325 = vld [vmem:[#allocation2] sm:$0x1]
    %327 = vset.pattern.permute.xlu0 0
    %328 = vperm.xlu0 %327, %v325
    %v329 = vpop.permute.xlu0 %328
    %v331 = vlaneseq
    %v332 = vshrl.u32 %v331, 7
    %v333 = vsub.s32 0, %v332
    %v334 = vrot.slane %v329, %v333
    %335 = vmatprep.subr.mxu0 0.0
    %336 = vmatpush1.xpose.msra.mxu0 %v323
    %337 = vmatprep.subr.mxu0 0.0
    %338 = vmatpush1.xpose.msra.mxu0 0.0
    %339 = vmatprep.subr.mxu0 0.0
    %340 = vmatpush1.xpose.msra.mxu0 0.0
    %341 = vmatprep.subr.mxu0 0.0
    %342 = vmatpush1.xpose.msra.mxu0 0.0
    %343 = vmatprep.subr.mxu0 0.0
    %344 = vmatpush1.xpose.msra.mxu0 0.0
    %345 = vmatprep.subr.mxu0 0.0
    %346 = vmatpush1.xpose.msra.mxu0 0.0
    %347 = vmatprep.subr.mxu0 0.0
    %348 = vmatpush1.xpose.msra.mxu0 0.0
    %349 = vmatprep.subr.mxu0 0.0
    %350 = vmatpush1.xpose.msra.mxu0 0.0
    %351 = vmatprep.subr.mxu0 0.0
    %352 = vmatpush1.xpose.msra.mxu0 0.0
    %353 = vmatprep.subr.mxu0 0.0
    %354 = vmatpush1.xpose.msra.mxu0 0.0
    %355 = vmatprep.subr.mxu0 0.0
    %356 = vmatpush1.xpose.msra.mxu0 0.0
    %357 = vmatprep.subr.mxu0 0.0
    %358 = vmatpush1.xpose.msra.mxu0 0.0
    %359 = vmatprep.subr.mxu0 0.0
    %360 = vmatpush1.xpose.msra.mxu0 0.0
    %361 = vmatprep.subr.mxu0 0.0
    %362 = vmatpush1.xpose.msra.mxu0 0.0
    %363 = vmatprep.subr.mxu0 0.0
    %364 = vmatpush1.xpose.msra.mxu0 0.0
    %365 = vmatprep.subr.mxu0 0.0
    %366 = vmatpush1.xpose.msra.mxu0 0.0
    %367 = vmatprep.subr.mxu0 0.0
    %368 = vmatpush1.xpose.msra.mxu0 0.0
    %369 = vmatprep.subr.mxu0 0.0
    %370 = vmatpush1.xpose.msra.mxu0 0.0
    %371 = vmatprep.subr.mxu0 0.0
    %372 = vmatpush1.xpose.msra.mxu0 0.0
    %373 = vmatprep.subr.mxu0 0.0
    %374 = vmatpush1.xpose.msra.mxu0 0.0
    %375 = vmatprep.subr.mxu0 0.0
    %376 = vmatpush1.xpose.msra.mxu0 0.0
    %377 = vmatprep.subr.mxu0 0.0
    %378 = vmatpush1.xpose.msra.mxu0 0.0
    %379 = vmatprep.subr.mxu0 0.0
    %380 = vmatpush1.xpose.msra.mxu0 0.0
    %381 = vmatprep.subr.mxu0 0.0
    %382 = vmatpush1.xpose.msra.mxu0 0.0
    %383 = vmatprep.subr.mxu0 0.0
    %384 = vmatpush1.xpose.msra.mxu0 0.0
    %385 = vmatprep.subr.mxu0 0.0
    %386 = vmatpush1.xpose.msra.mxu0 0.0
    %387 = vmatprep.subr.mxu0 0.0
    %388 = vmatpush1.xpose.msra.mxu0 0.0
    %389 = vmatprep.subr.mxu0 0.0
    %390 = vmatpush1.xpose.msra.mxu0 0.0
    %391 = vmatprep.subr.mxu0 0.0
    %392 = vmatpush1.xpose.msra.mxu0 0.0
    %393 = vmatprep.subr.mxu0 0.0
    %394 = vmatpush1.xpose.msra.mxu0 0.0
    %395 = vmatprep.subr.mxu0 0.0
    %396 = vmatpush1.xpose.msra.mxu0 0.0
    %397 = vmatprep.subr.mxu0 0.0
    %398 = vmatpush1.xpose.msra.mxu0 0.0
    %399 = vmatprep.mubr.f32.mxu0 0.0
    %400 = vmatmul.mubr.f32.gmra.mrb[0].mxu0 %v324
    %v401 = vpop.f32.mrb[0].mxu0
    %v402 = vadd.f32 %v334, %v401
    %v403 = vpop.f32.mrb[0].mxu0
    %404 = vdwg.mxu0
    %vm405 = vcmask 57344
    %406 = vst.msk [vmem:[#allocation8] sm:$0x1] %vm405, %v402
    // Predicated region
    $region46: #{tpu_custom_call.1} parent=1 // pred_check
      _
    $region47: #{tpu_custom_call.1} parent=1 // pred_check_branch
      %408 = sbr.rel (0) target = $region49
    $region48: #{tpu_custom_call.1} parent=1 // pred_region
      %s410 = ssub.s32 16, 16
      %411 = vsyncadd [#allocation5], %s410
      %s413 = sshll.u32 [#allocation8], 4
      %s414 = int_to_ptr.vmem [resolvable:$true] %s413
      %416 = dma.vmem_to_hbm [thread:$0]  %s414, 16, %s9, [#allocation5]
    $region49: #{tpu_custom_call.1} parent=1 // pred_fallthru
      _
    // Predicated region
    $region50: #{tpu_custom_call.1} parent=1 // pred_check
      _
    $region51: #{tpu_custom_call.1} parent=1 // pred_check_branch
      %418 = sbr.rel (0) target = $region53
    $region52: #{tpu_custom_call.1} parent=1 // pred_region
      %419 = dma.done [#allocation5], 16
    $region53: #{tpu_custom_call.1} parent=1 // pred_fallthru
      _
    %420 = vsyncpa [#allocation4], 1
    %421 = vsyncpa [#allocation7], 1
    %422 = vsyncpa [#allocation5], 1

</llo_original>
